<compile_context>
chip_gen: v7x
topology: tpu7x:2x2x1
jax: 0.10.0
libtpu: 0.0.40
codegen_flags: <defaults>
</compile_context>

<pallas_src>
import functools

import jax
import jax.numpy as jnp
from jax.experimental import pallas as pl
from jax.experimental.pallas import tpu as pltpu

_MIN_PALLAS_BYTES = 64 * 1024          # below this, skip Pallas and let XLA fuse it
_LANE_WIDTHS = (1024, 512, 256, 128)   # preferred lane-dense slab widths


def _device_block_params():
    """Returns (block_bytes, vmem_limit_bytes or None, force_two_grid_steps)."""
    try:
        kind = jax.devices()[0].device_kind.lower()
    except Exception:
        kind = ""
    if "v5" in kind and ("lite" in kind or "v5e" in kind):
        # v5e: 16 MiB scoped-VMEM default binds; 4 x 3 MiB = 12 MiB fits without a bump.
        return 3 << 20, None, False
    if "v6" in kind:
        # v6e (~1.4 TB/s): 6 MiB blocks amortize the ~0.35 us per-step overhead.
        return 6 << 20, 48 << 20, False
    if "v7" in kind or "tpu7" in kind or "7x" in kind:
        # v7x (~3.2 TB/s, 64 MiB VMEM/TC, 2 TCs): 8 MiB blocks, 32 MiB resident,
        # and force >= 2 grid steps so both TensorCores stream.
        return 8 << 20, 48 << 20, True
    # Unknown / older generation: moderate and safe everywhere.
    return 4 << 20, 40 << 20, False


def _pick_tile_rows(rows, row_bytes, sublane, block_bytes, force_two):
    """Rows per block: <= block_bytes, sublane-aligned when multi-block, and
    split into >= 2 blocks when force_two (v7x megacore) permits."""
    budget = max(sublane, int(block_bytes) // int(row_bytes))
    tile = min(rows, budget)
    half = -(-rows // 2)  # ceil(rows / 2)
    if force_two and rows >= 2 * sublane and tile > half:
        tile = -(-half // sublane) * sublane          # round_up(ceil(rows/2), sublane)
    if tile < rows:
        tile = max(sublane, (tile // sublane) * sublane)  # sublane multiple when tiled
    else:
        tile = rows                                       # single full-extent block
    return int(tile)


def _xrelu_kernel(x_ref, o_ref, *, kind):
    """Elementwise activation on one [tile_r, W] block (VPU/EUP path)."""
    x = x_ref[...]
    if kind == "ReLU":
        o_ref[...] = jnp.maximum(x, jnp.zeros_like(x))
    elif kind == "ELU":
        # F.elu(x, alpha=1): x if x > 0 else exp(x) - 1   (expm1 -> EUP)
        o_ref[...] = jnp.where(x > 0, x, jnp.expm1(x))
    elif kind == "LReLU":
        o_ref[...] = jnp.where(x >= 0, x, jnp.asarray(0.01, x.dtype) * x)
    else:
        o_ref[...] = x


def _xrelu_prelu_kernel(alpha_ref, x_ref, o_ref):
    """PReLU with the scalar weight read from SMEM."""
    x = x_ref[...]
    a = alpha_ref[0].astype(x.dtype)
    o_ref[...] = jnp.where(x >= 0, x, a * x)


def _jnp_xrelu(x, kind, alpha):
    """Plain-XLA fallback (small inputs / pathological shapes)."""
    if kind == "ReLU":
        return jnp.maximum(x, jnp.zeros_like(x))
    if kind == "PReLU":
        return jnp.where(x >= 0, x, alpha.astype(x.dtype) * x)
    if kind == "ELU":
        return jnp.where(x > 0, x, jnp.expm1(x))
    if kind == "LReLU":
        return jnp.where(x >= 0, x, jnp.asarray(0.01, x.dtype) * x)
    return x


def xrelu(x, edge_index, *, kind, prelu_weight=None):
    """Pallas wrapper mirroring xReLU.forward(x, edge_index).

    x            : float array of any shape
    edge_index   : ignored (kept for API parity with the PyTorch module)
    kind         : 'ReLU' | 'PReLU' | 'ELU' | 'LReLU' | anything-else => identity
    prelu_weight : scalar PReLU parameter (only used when kind == 'PReLU')
    """
    del edge_index  # not used by the forward pass

    if kind not in ("ReLU", "PReLU", "ELU", "LReLU"):
        return x  # identity branch of the module

    x = jnp.asarray(x)
    orig_shape = x.shape
    dtype = x.dtype
    total = int(x.size)
    if total == 0:
        return x

    if kind == "PReLU":
        if prelu_weight is None:
            prelu_weight = 0.25  # torch.nn.PReLU() default init
        alpha = jnp.asarray(prelu_weight, jnp.float32).reshape(1)
    else:
        alpha = None

    itemsize = jnp.dtype(dtype).itemsize

    # Small-input bypass: launch + layout plumbing dominates; XLA fusion wins.
    if total * itemsize < _MIN_PALLAS_BYTES:
        return _jnp_xrelu(x, kind, alpha)

    block_bytes, vmem_limit, force_two = _device_block_params()
    sublane = 8 * max(1, 4 // itemsize)  # 8 rows f32, 16 bf16, 32 int8

    # Choose a copy-free 2-D view (reshape of a contiguous array is free; no
    # jnp.pad / output-slice copies => exactly 2 HBM passes for the whole op).
    if total % 128 == 0:
        W = next(w for w in _LANE_WIDTHS if total % w == 0)  # lane-dense, unmasked stores
    elif x.ndim >= 2 and int(x.shape[-1]) * itemsize <= block_bytes:
        W = int(x.shape[-1])  # natural feature width: masked stores but still copy-free
    else:
        # TODO(synk): large 1-D inputs whose size is not a multiple of 128 would need a
        # padded copy to reach a lane-dense layout; plain XLA elementwise is already at
        # HBM roofline for that case, so fall back.
        return _jnp_xrelu(x, kind, alpha)

    rows = total // W
    row_bytes = W * itemsize
    x2d = x.reshape(rows, W)

    tile_r = _pick_tile_rows(rows, row_bytes, sublane, block_bytes, force_two)
    grid_n = pl.cdiv(rows, tile_r)

    block_spec = pl.BlockSpec((tile_r, W), lambda i: (i, 0))
    out_shape = jax.ShapeDtypeStruct((rows, W), dtype)

    cp_kwargs = dict(dimension_semantics=("parallel",))
    if vmem_limit is not None:
        cp_kwargs["vmem_limit_bytes"] = int(vmem_limit)
    compiler_params = pltpu.CompilerParams(**cp_kwargs)

    if kind == "PReLU":
        out2d = pl.pallas_call(
            _xrelu_prelu_kernel,
            out_shape=out_shape,
            grid=(grid_n,),
            in_specs=[
                pl.BlockSpec(memory_space=pltpu.MemorySpace.SMEM),  # alpha scalar
                block_spec,
            ],
            out_specs=block_spec,
            compiler_params=compiler_params,
        )(alpha, x2d)
    else:
        out2d = pl.pallas_call(
            functools.partial(_xrelu_kernel, kind=kind),
            out_shape=out_shape,
            grid=(grid_n,),
            in_specs=[block_spec],
            out_specs=block_spec,
            compiler_params=compiler_params,
        )(x2d)

    return out2d.reshape(orig_shape)


def _ref(x, kind, a):
    if kind == "ReLU":
        return jnp.maximum(x, 0.0)
    if kind == "PReLU":
        return jnp.where(x >= 0, x, a * x)
    if kind == "ELU":
        return jnp.where(x > 0, x, jnp.expm1(x))
    if kind == "LReLU":
        return jnp.where(x >= 0, x, 0.01 * x)
    return x


if __name__ == "__main__":
    key = jax.random.PRNGKey(0)
    k1, k2, k3, ke = jax.random.split(key, 4)

    prelu_a = jnp.float32(0.25)  # deterministic PReLU param (PyTorch default)
    ok = True

    # Case 1: tiny GNN-ish input (16 nodes, 128 channels, 8 edges)
    #         -> exercises the small-input jnp bypass.
    N1, F1, E = 16, 128, 8
    x1 = jax.random.normal(k1, (N1, F1), dtype=jnp.float32)
    edge_index = jax.random.randint(ke, (2, E), 0, N1, dtype=jnp.int32)

    # Case 2: ragged feature width (not a multiple of 128)
    #         -> copy-free natural-view kernel path (no pad, no output slice).
    x2 = jax.random.normal(k2, (200, 100), dtype=jnp.float32)

    # Case 3: element count a multiple of 1024
    #         -> lane-dense [rows, 1024] kernel path (multi-block grid on v7x).
    x3 = jax.random.normal(k3, (256, 512), dtype=jnp.float32)

    for x in (x1, x2, x3):
        for kind in ["ReLU", "PReLU", "ELU", "LReLU", "identity"]:
            out = xrelu(x, edge_index, kind=kind, prelu_weight=prelu_a)
            out = jax.block_until_ready(out)
            ref = _ref(x, kind, prelu_a)
            if out.shape != x.shape or not jnp.allclose(out, ref, atol=1e-5, rtol=1e-5):
                ok = False
                print(f"MISMATCH for kind={kind}, shape={x.shape}")

    if ok:
        print("KERNEL_OK")
</pallas_src>

<mosaic_0001>
module attributes {stable_mosaic.version = 11 : i64} {
  func.func @_xrelu_kernel(%arg0: i32, %arg1: memref<200x100xf32, #tpu.memory_space<vmem>>, %arg2: memref<200x100xf32, #tpu.memory_space<vmem>>) attributes {dimension_semantics = [#tpu.dimension_semantics<parallel>], iteration_bounds = array<i64: 1>, scalar_prefetch = 0 : i64, scratch_operands = 0 : i64, tpu.core_type = #tpu.core_type<tc>, window_params = [{transform_indices = @transform_0, window_bounds = array<i64: 200, 100>}, {transform_indices = @transform_1, window_bounds = array<i64: 200, 100>}]} {
    %c0 = arith.constant 0 : index
    %c0_0 = arith.constant 0 : index
    %0 = vector.load %arg1[%c0, %c0_0] : memref<200x100xf32, #tpu.memory_space<vmem>>, vector<200x100xf32>
    %cst = arith.constant 0.000000e+00 : f32
    %1 = vector.broadcast %cst : f32 to vector<200x100xf32>
    %2 = arith.maximumf %0, %1 : vector<200x100xf32>
    %c0_1 = arith.constant 0 : index
    %c0_2 = arith.constant 0 : index
    %3 = vector.load %arg2[%c0_1, %c0_2] : memref<200x100xf32, #tpu.memory_space<vmem>>, vector<200x100xf32>
    tpu.vector_store %arg2[%c0_1, %c0_2], %2 {strides = array<i32>} : memref<200x100xf32, #tpu.memory_space<vmem>>, vector<200x100xf32>,
    return
  }
  func.func @transform_0(%arg0: i32) -> (i32, i32) {
    %c0_i32 = arith.constant 0 : i32
    %c0_i32_0 = arith.constant 0 : i32
    return %arg0, %c0_i32 : i32, i32
  }
  func.func @transform_1(%arg0: i32) -> (i32, i32) {
    %c0_i32 = arith.constant 0 : i32
    %c0_i32_0 = arith.constant 0 : i32
    return %arg0, %c0_i32 : i32, i32
  }
}

</mosaic_0001>

<llo_original>
// kernel: tpu_custom_call.1
$region0: #{tpu_custom_call.1}
  #allocation0 [shape = 'u32[]', space=smem, size = 0x4, offset = 0x4, fixed_abs, tag = 'smem constant byte address 0x4 - core index']
  #allocation1 [shape = 'u32[144,128]{1,0:T(1,128)}', space=vmem, size = 0x12000, scoped, tag = 'internal scratch']
  %s0 = inlined_call_operand.hbm [shape: f32[200,100], index: 0, kind: input, shape index: {}]
  %s1 = inlined_call_operand.hbm [shape: f32[200,100], index: 1, kind: output, shape index: {}]
  %s2 = sld [smem:[#allocation0]]
  $region18: #{tpu_custom_call.1} parent=0
    _
  %s4 = ssub.s32 1, %s2
  %s5 = scalar_select 0, %s4, %s2
  $region1: #{tpu_custom_call.1} parent=0
    #allocation2 [shape = 'u8[102400]{0}', space=vmem, size = 0x19000, scoped, tag = 'input window, operand 0, single buffered']
    #allocation3 [shape = 's32[1]{0}', space=sflag, size = 0x4, scoped, tag = 'scoped memory for tpu_custom_call.1']
    #allocation4 [shape = 's32[1]{0}', space=sflag, size = 0x4, scoped, tag = 'scoped memory for tpu_custom_call.1']
    #allocation5 [shape = 'u8[102400]{0}', space=vmem, size = 0x19000, scoped, tag = 'output window, operand 0, single buffered']
    %6 = vsyncpa [#allocation3], 0
    %7 = vsyncpa [#allocation4], 0
    // Predicated region
    $region2: #{tpu_custom_call.1} parent=1 // pred_check
      _
    $region3: #{tpu_custom_call.1} parent=1 // pred_check_branch
      %9 = sbr.rel (0) target = $region5
    $region4: #{tpu_custom_call.1} parent=1 // pred_region
      %s11 = ssub.s32 3200, 3200
      %12 = vsyncadd [#allocation3], %s11
      %s13 = sshll.u32 [#allocation2], 4
      %s14 = int_to_ptr.vmem [resolvable:$true] %s13
      %19 = dma.hbm_to_vmem [thread:$0]  %s0, 3200, %s14, [#allocation3], 128, 128, 8
    $region5: #{tpu_custom_call.1} parent=1 // pred_fallthru
      _
    // Predicated region
    $region6: #{tpu_custom_call.1} parent=1 // pred_check
      _
    $region7: #{tpu_custom_call.1} parent=1 // pred_check_branch
      %21 = sbr.rel (0) target = $region9
    $region8: #{tpu_custom_call.1} parent=1 // pred_region
      %22 = dma.done [#allocation3], 3200
    $region9: #{tpu_custom_call.1} parent=1 // pred_fallthru
      _
    %v23 = vld [vmem:[#allocation2] sm:$0xff]
    %v24 = vld [vmem:[#allocation2 + $0x8] sm:$0xff]
    %v25 = vld [vmem:[#allocation2 + $0x10] sm:$0xff]
    %v26 = vld [vmem:[#allocation2 + $0x18] sm:$0xff]
    %v27 = vld [vmem:[#allocation2 + $0x20] sm:$0xff]
    %v28 = vld [vmem:[#allocation2 + $0x28] sm:$0xff]
    %v29 = vld [vmem:[#allocation2 + $0x30] sm:$0xff]
    %v30 = vld [vmem:[#allocation2 + $0x38] sm:$0xff]
    %v31 = vld [vmem:[#allocation2 + $0x40] sm:$0xff]
    %v32 = vld [vmem:[#allocation2 + $0x48] sm:$0xff]
    %v33 = vld [vmem:[#allocation2 + $0x50] sm:$0xff]
    %v34 = vld [vmem:[#allocation2 + $0x58] sm:$0xff]
    %v35 = vld [vmem:[#allocation2 + $0x60] sm:$0xff]
    %v36 = vld [vmem:[#allocation2 + $0x68] sm:$0xff]
    %v37 = vld [vmem:[#allocation2 + $0x70] sm:$0xff]
    %v38 = vld [vmem:[#allocation2 + $0x78] sm:$0xff]
    %v39 = vld [vmem:[#allocation2 + $0x80] sm:$0xff]
    %v40 = vld [vmem:[#allocation2 + $0x88] sm:$0xff]
    %v41 = vld [vmem:[#allocation2 + $0x90] sm:$0xff]
    %v42 = vld [vmem:[#allocation2 + $0x98] sm:$0xff]
    %v43 = vld [vmem:[#allocation2 + $0xa0] sm:$0xff]
    %v44 = vld [vmem:[#allocation2 + $0xa8] sm:$0xff]
    %v45 = vld [vmem:[#allocation2 + $0xb0] sm:$0xff]
    %v46 = vld [vmem:[#allocation2 + $0xb8] sm:$0xff]
    %v47 = vld [vmem:[#allocation2 + $0xc0] sm:$0xff]
    %v48 = vmax.f32 %v23, 0.0
    %v49 = vmax.f32 %v24, 0.0
    %v50 = vmax.f32 %v25, 0.0
    %v51 = vmax.f32 %v26, 0.0
    %v52 = vmax.f32 %v27, 0.0
    %v53 = vmax.f32 %v28, 0.0
    %v54 = vmax.f32 %v29, 0.0
    %v55 = vmax.f32 %v30, 0.0
    %v56 = vmax.f32 %v31, 0.0
    %v57 = vmax.f32 %v32, 0.0
    %v58 = vmax.f32 %v33, 0.0
    %v59 = vmax.f32 %v34, 0.0
    %v60 = vmax.f32 %v35, 0.0
    %v61 = vmax.f32 %v36, 0.0
    %v62 = vmax.f32 %v37, 0.0
    %v63 = vmax.f32 %v38, 0.0
    %v64 = vmax.f32 %v39, 0.0
    %v65 = vmax.f32 %v40, 0.0
    %v66 = vmax.f32 %v41, 0.0
    %v67 = vmax.f32 %v42, 0.0
    %v68 = vmax.f32 %v43, 0.0
    %v69 = vmax.f32 %v44, 0.0
    %v70 = vmax.f32 %v45, 0.0
    %v71 = vmax.f32 %v46, 0.0
    %v72 = vmax.f32 %v47, 0.0
    %vm73 = vcmask 818176
    %74 = vst.msk [vmem:[#allocation5] sm:$0xff] %vm73, %v48
    %75 = vst.msk [vmem:[#allocation5 + $0x8] sm:$0xff] %vm73, %v49
    %76 = vst.msk [vmem:[#allocation5 + $0x10] sm:$0xff] %vm73, %v50
    %77 = vst.msk [vmem:[#allocation5 + $0x18] sm:$0xff] %vm73, %v51
    %78 = vst.msk [vmem:[#allocation5 + $0x20] sm:$0xff] %vm73, %v52
    %79 = vst.msk [vmem:[#allocation5 + $0x28] sm:$0xff] %vm73, %v53
    %80 = vst.msk [vmem:[#allocation5 + $0x30] sm:$0xff] %vm73, %v54
    %81 = vst.msk [vmem:[#allocation5 + $0x38] sm:$0xff] %vm73, %v55
    %82 = vst.msk [vmem:[#allocation5 + $0x40] sm:$0xff] %vm73, %v56
    %83 = vst.msk [vmem:[#allocation5 + $0x48] sm:$0xff] %vm73, %v57
    %84 = vst.msk [vmem:[#allocation5 + $0x50] sm:$0xff] %vm73, %v58
    %85 = vst.msk [vmem:[#allocation5 + $0x58] sm:$0xff] %vm73, %v59
    %86 = vst.msk [vmem:[#allocation5 + $0x60] sm:$0xff] %vm73, %v60
    %87 = vst.msk [vmem:[#allocation5 + $0x68] sm:$0xff] %vm73, %v61
    %88 = vst.msk [vmem:[#allocation5 + $0x70] sm:$0xff] %vm73, %v62
    %89 = vst.msk [vmem:[#allocation5 + $0x78] sm:$0xff] %vm73, %v63
    %90 = vst.msk [vmem:[#allocation5 + $0x80] sm:$0xff] %vm73, %v64
    %91 = vst.msk [vmem:[#allocation5 + $0x88] sm:$0xff] %vm73, %v65
    %92 = vst.msk [vmem:[#allocation5 + $0x90] sm:$0xff] %vm73, %v66
    %93 = vst.msk [vmem:[#allocation5 + $0x98] sm:$0xff] %vm73, %v67
    %94 = vst.msk [vmem:[#allocation5 + $0xa0] sm:$0xff] %vm73, %v68
    %95 = vst.msk [vmem:[#allocation5 + $0xa8] sm:$0xff] %vm73, %v69
    %96 = vst.msk [vmem:[#allocation5 + $0xb0] sm:$0xff] %vm73, %v70
    %97 = vst.msk [vmem:[#allocation5 + $0xb8] sm:$0xff] %vm73, %v71
    %98 = vst.msk [vmem:[#allocation5 + $0xc0] sm:$0xff] %vm73, %v72
    // Predicated region
    $region10: #{tpu_custom_call.1} parent=1 // pred_check
      _
    $region11: #{tpu_custom_call.1} parent=1 // pred_check_branch
      %100 = sbr.rel (0) target = $region13
    $region12: #{tpu_custom_call.1} parent=1 // pred_region
      %s102 = ssub.s32 3200, 3200
      %103 = vsyncadd [#allocation4], %s102
      %s104 = sshll.u32 [#allocation5], 4
      %s105 = int_to_ptr.vmem [resolvable:$true] %s104
      %110 = dma.vmem_to_hbm [thread:$0]  %s105, 3200, %s1, [#allocation4], 128, 128, 8
    $region13: #{tpu_custom_call.1} parent=1 // pred_fallthru
      _
    // Predicated region
    $region14: #{tpu_custom_call.1} parent=1 // pred_check
      _
    $region15: #{tpu_custom_call.1} parent=1 // pred_check_branch
      %112 = sbr.rel (0) target = $region17
    $region16: #{tpu_custom_call.1} parent=1 // pred_region
      %113 = dma.done [#allocation4], 3200
    $region17: #{tpu_custom_call.1} parent=1 // pred_fallthru
      _
    %114 = vsyncpa [#allocation3], 1
    %115 = vsyncpa [#allocation4], 1

</llo_original>
